<compile_context>
chip_gen: v7x
topology: tpu7x:2x2x1
jax: 0.10.0
libtpu: 0.0.40
codegen_flags: <defaults>
</compile_context>

<pallas_src>
import functools

import jax
import jax.numpy as jnp
from jax.experimental import pallas as pl
from jax.experimental.pallas import tpu as pltpu

_LANES = 128                     # lane-dense width; keeps the free-reshape path open for
                                 # any element count that is a multiple of 128.
_TILE_BYTES = 4 * 1024 * 1024    # per-input block byte budget (f32 -> 8192 x 128 rows)
_VMEM_LIMIT = 32 * 1024 * 1024   # 2 inputs x 2 bufs x 4 MiB + <=8 MiB f32 accumulator


def _content_loss_kernel(x_ref, t_ref, out_ref, acc_ref, *,
                         inner_blocks, tile_rows, rows_valid, needs_mask):
    p = pl.program_id(0)   # per-core partial (parallel axis)
    i = pl.program_id(1)   # streaming / reduction axis (arbitrary)

    @pl.when(i == 0)
    def _():
        acc_ref[...] = jnp.zeros_like(acc_ref)

    d = x_ref[...].astype(jnp.float32) - t_ref[...].astype(jnp.float32)
    sq = d * d

    if needs_mask:
        # Zero rows past the true extent: covers the partial last block and the
        # duplicate block DMA'd when the clamped index_map repeats a tile.
        r0 = (p * inner_blocks + i) * tile_rows
        row_ids = r0 + jax.lax.broadcasted_iota(jnp.int32, sq.shape, 0)
        sq = jnp.where(row_ids < rows_valid, sq, jnp.float32(0.0))

    # Vector accumulator: pure VPU work each step (no per-step XLU reduce), and
    # blocked summation is kinder to f32 rounding on huge tensors.
    acc_ref[...] += sq

    @pl.when(i == inner_blocks - 1)
    def _():
        s = jnp.sum(acc_ref[...])                       # one XLU reduce per sweep
        out_ref[...] = jnp.broadcast_to(s, out_ref.shape).astype(jnp.float32)


def content_loss(x, target, *, tile_bytes=_TILE_BYTES):
    """ContentLoss.forward: returns (input_passthrough, mse_loss_scalar_f32)."""
    assert x.shape == target.shape, "input and target must have the same shape"
    n_true = x.size
    if n_true == 0:
        return x, jnp.float32(0.0)

    lanes = _LANES
    x_flat = jnp.ravel(x)          # free bitcast of contiguous buffer
    t_flat = jnp.ravel(target)     # keep native dtype (no downcast of target)

    rows = n_true // lanes
    n_main = rows * lanes
    tail_n = n_true - n_main

    # Sub-128-element tail (only when n_true % 128 != 0): trivial plain-JAX sum.
    if tail_n:
        dt_ = x_flat[n_main:].astype(jnp.float32) - t_flat[n_main:].astype(jnp.float32)
        tail_sq = jnp.sum(dt_ * dt_)
    else:
        tail_sq = jnp.float32(0.0)

    if rows == 0:   # tensor smaller than one lane row -> nothing for the kernel
        return x, tail_sq / jnp.float32(n_true)

    # Lane-dense 2-D view; when n_true % 128 == 0 this is a free reshape (no pad).
    if tail_n:
        x2 = x_flat[:n_main].reshape(rows, lanes)
        t2 = t_flat[:n_main].reshape(rows, lanes)
    else:
        x2 = x_flat.reshape(rows, lanes)
        t2 = t_flat.reshape(rows, lanes)

    # Tile rows from a byte budget, rounded to a multiple of 8 for the (8,128) rule.
    itemsize_x = jnp.dtype(x.dtype).itemsize
    itemsize_t = jnp.dtype(target.dtype).itemsize
    itemsize = max(itemsize_x, itemsize_t)
    budget_rows = max(8, (int(tile_bytes) // (lanes * itemsize)) // 8 * 8)
    tile_rows = rows if rows <= budget_rows else budget_rows   # full-extent block is legal

    total_blocks = pl.cdiv(rows, tile_rows)
    num_partials = 2 if total_blocks >= 2 else 1   # one partial per TensorCore (v7x)
    inner_blocks = pl.cdiv(total_blocks, num_partials)
    needs_mask = (num_partials * inner_blocks * tile_rows) != rows

    def in_index(p, i):
        blk = p * inner_blocks + i
        # Clamp to a valid block; any duplicated block is fully masked in-kernel.
        return (jnp.minimum(blk, total_blocks - 1), 0)

    kernel = functools.partial(
        _content_loss_kernel,
        inner_blocks=inner_blocks, tile_rows=tile_rows,
        rows_valid=rows, needs_mask=needs_mask)

    partials = pl.pallas_call(
        kernel,
        out_shape=jax.ShapeDtypeStruct((num_partials, 8, lanes), jnp.float32),
        grid_spec=pltpu.PrefetchScalarGridSpec(
            num_scalar_prefetch=0,
            grid=(num_partials, inner_blocks),
            in_specs=[
                pl.BlockSpec((tile_rows, lanes), in_index),
                pl.BlockSpec((tile_rows, lanes), in_index),
            ],
            out_specs=pl.BlockSpec((1, 8, lanes), lambda p, i: (p, 0, 0)),
            scratch_shapes=[pltpu.VMEM((tile_rows, lanes), jnp.float32)],
        ),
        compiler_params=pltpu.CompilerParams(
            dimension_semantics=("parallel", "arbitrary"),
            vmem_limit_bytes=_VMEM_LIMIT,
        ),
        cost_estimate=pl.CostEstimate(
            flops=3 * n_main,
            transcendentals=0,
            bytes_accessed=n_main * (itemsize_x + itemsize_t),
        ),
    )(x2, t2)

    main_sq = jnp.sum(partials[:, 0, 0])
    mse = (main_sq + tail_sq) / jnp.float32(n_true)

    # Identity passthrough is free in the wrapper -- no kernel writeback needed.
    return x, mse


def content_loss_ref(x, target):
    d = x.astype(jnp.float32) - target.astype(jnp.float32)
    return x, jnp.mean(d * d)


def _check(name, got, want, rtol=1e-5, atol=1e-6):
    assert jnp.allclose(got, want, rtol=rtol, atol=atol), \
        f"{name} mismatch: {got} vs {want}"


if __name__ == "__main__":
    key = jax.random.PRNGKey(0)
    k1, k2, k3, k4, k5, k6 = jax.random.split(key, 6)

    # 1) NCHW: batch=2, channels=4, spatial=16x16 -> 2048 elements (single tile).
    x = jax.random.normal(k1, (2, 4, 16, 16), dtype=jnp.float32)
    target = jax.random.normal(k2, (2, 4, 16, 16), dtype=jnp.float32)
    y, loss = content_loss(x, target)
    jax.block_until_ready((y, loss))
    y_ref, loss_ref_v = content_loss_ref(x, target)
    assert jnp.allclose(y, y_ref), "passthrough mismatch"
    _check("loss", loss, loss_ref_v)

    # 2) Ragged shape (210 elements, not a multiple of 128) -> JAX tail path, no pad.
    xr = jax.random.normal(k3, (2, 3, 7, 5), dtype=jnp.float32)
    tr = jax.random.normal(k4, (2, 3, 7, 5), dtype=jnp.float32)
    _, lossr = content_loss(xr, tr)
    jax.block_until_ready(lossr)
    _check("ragged loss", lossr, content_loss_ref(xr, tr)[1])

    # 3) Multi-tile, even split across the two partials (grid = (2, 1)).
    xm = jax.random.normal(k5, (2, 4, 32, 32), dtype=jnp.float32)   # 8192 elems = 64 rows
    tm = jax.random.normal(k6, (2, 4, 32, 32), dtype=jnp.float32)
    _, lossm = content_loss(xm, tm, tile_bytes=16 * 1024)           # tile_rows = 32
    jax.block_until_ready(lossm)
    _check("multi-tile loss", lossm, content_loss_ref(xm, tm)[1])

    # 4) Multi-tile with a partial last block + clamped duplicate block -> mask path.
    _, lossu = content_loss(xm, tm, tile_bytes=12 * 1024)           # tile_rows = 24, 3 blocks
    jax.block_until_ready(lossu)
    _check("masked multi-tile loss", lossu, content_loss_ref(xm, tm)[1])

    # 5) Mixed dtypes: bf16 input vs f32 target (no target downcast; f32 math in-kernel).
    xb = x.astype(jnp.bfloat16)
    _, lossb = content_loss(xb, target)
    jax.block_until_ready(lossb)
    _check("mixed-dtype loss", lossb, content_loss_ref(xb, target)[1])

    print("KERNEL_OK")
</pallas_src>

<mosaic_0001>
module attributes {stable_mosaic.version = 11 : i64} {
  func.func @_content_loss_kernel(%arg0: i32, %arg1: i32, %arg2: memref<16x128xf32, #tpu.memory_space<vmem>>, %arg3: memref<16x128xf32, #tpu.memory_space<vmem>>, %arg4: memref<1x8x128xf32, #tpu.memory_space<vmem>>, %arg5: memref<16x128xf32, #tpu.memory_space<vmem>>) attributes {dimension_semantics = [#tpu.dimension_semantics<parallel>, #tpu.dimension_semantics<arbitrary>], iteration_bounds = array<i64: 1, 1>, scalar_prefetch = 0 : i64, scratch_operands = 1 : i64, tpu.core_type = #tpu.core_type<tc>, window_params = [{transform_indices = @transform_0, window_bounds = array<i64: 16, 128>}, {transform_indices = @transform_1, window_bounds = array<i64: 16, 128>}, {transform_indices = @transform_2, window_bounds = array<i64: 1, 8, 128>}]} {
    %c0_i32 = arith.constant 0 : i32
    %0 = arith.cmpi eq, %arg1, %c0_i32 : i32
    %1 = arith.extui %0 : i1 to i32
    %c0_i32_0 = arith.constant 0 : i32
    %2 = arith.cmpi ne, %1, %c0_i32_0 : i32
    scf.if %2 {
      %cst = arith.constant 0.000000e+00 : f32
      %13 = vector.broadcast %cst : f32 to vector<16x128xf32>
      %c0_10 = arith.constant 0 : index
      %c0_11 = arith.constant 0 : index
      %14 = vector.load %arg5[%c0_10, %c0_11] : memref<16x128xf32, #tpu.memory_space<vmem>>, vector<16x128xf32>
      tpu.vector_store %arg5[%c0_10, %c0_11], %13 {strides = array<i32>} : memref<16x128xf32, #tpu.memory_space<vmem>>, vector<16x128xf32>,
    } else {
    }
    %c0 = arith.constant 0 : index
    %c0_1 = arith.constant 0 : index
    %3 = vector.load %arg2[%c0, %c0_1] : memref<16x128xf32, #tpu.memory_space<vmem>>, vector<16x128xf32>
    %c0_2 = arith.constant 0 : index
    %c0_3 = arith.constant 0 : index
    %4 = vector.load %arg3[%c0_2, %c0_3] : memref<16x128xf32, #tpu.memory_space<vmem>>, vector<16x128xf32>
    %5 = arith.subf %3, %4 : vector<16x128xf32>
    %6 = arith.mulf %5, %5 : vector<16x128xf32>
    %c0_4 = arith.constant 0 : index
    %c0_5 = arith.constant 0 : index
    %7 = vector.load %arg5[%c0_4, %c0_5] : memref<16x128xf32, #tpu.memory_space<vmem>>, vector<16x128xf32>
    %8 = arith.addf %7, %6 : vector<16x128xf32>
    %c0_6 = arith.constant 0 : index
    %c0_7 = arith.constant 0 : index
    %9 = vector.load %arg5[%c0_6, %c0_7] : memref<16x128xf32, #tpu.memory_space<vmem>>, vector<16x128xf32>
    tpu.vector_store %arg5[%c0_6, %c0_7], %8 {strides = array<i32>} : memref<16x128xf32, #tpu.memory_space<vmem>>, vector<16x128xf32>,
    %c0_i32_8 = arith.constant 0 : i32
    %10 = arith.cmpi eq, %arg1, %c0_i32_8 : i32
    %11 = arith.extui %10 : i1 to i32
    %c0_i32_9 = arith.constant 0 : i32
    %12 = arith.cmpi ne, %11, %c0_i32_9 : i32
    scf.if %12 {
      %c0_10 = arith.constant 0 : index
      %c0_11 = arith.constant 0 : index
      %13 = vector.load %arg5[%c0_10, %c0_11] : memref<16x128xf32, #tpu.memory_space<vmem>>, vector<16x128xf32>
      %14 = vector.shape_cast %13 : vector<16x128xf32> to vector<1x16x128xf32>
      %cst = arith.constant dense<0.000000e+00> : vector<1xf32>
      %15 = vector.multi_reduction <add>, %14, %cst [1, 2] : vector<1x16x128xf32> to vector<1xf32>
      %16 = vector.shape_cast %15 : vector<1xf32> to vector<1x1x1xf32>
      %17 = vector.extract %16[0, 0, 0] : f32 from vector<1x1x1xf32>
      %18 = vector.broadcast %17 : f32 to vector<1x8x128xf32>
      %c0_12 = arith.constant 0 : index
      %c0_13 = arith.constant 0 : index
      %c0_14 = arith.constant 0 : index
      %19 = vector.load %arg4[%c0_12, %c0_13, %c0_14] : memref<1x8x128xf32, #tpu.memory_space<vmem>>, vector<1x8x128xf32>
      tpu.vector_store %arg4[%c0_12, %c0_13, %c0_14], %18 {strides = array<i32>} : memref<1x8x128xf32, #tpu.memory_space<vmem>>, vector<1x8x128xf32>,
    } else {
    }
    return
  }
  func.func @transform_0(%arg0: i32, %arg1: i32) -> (i32, i32) {
    %c1_i32 = arith.constant 1 : i32
    %0 = arith.muli %arg0, %c1_i32 : i32
    %1 = arith.addi %0, %arg1 : i32
    %c0_i32 = arith.constant 0 : i32
    %2 = arith.minsi %1, %c0_i32 : i32
    %c0_i32_0 = arith.constant 0 : i32
    %c0_i32_1 = arith.constant 0 : i32
    return %2, %c0_i32_0 : i32, i32
  }
  func.func @transform_1(%arg0: i32, %arg1: i32) -> (i32, i32) {
    %c1_i32 = arith.constant 1 : i32
    %0 = arith.muli %arg0, %c1_i32 : i32
    %1 = arith.addi %0, %arg1 : i32
    %c0_i32 = arith.constant 0 : i32
    %2 = arith.minsi %1, %c0_i32 : i32
    %c0_i32_0 = arith.constant 0 : i32
    %c0_i32_1 = arith.constant 0 : i32
    return %2, %c0_i32_0 : i32, i32
  }
  func.func @transform_2(%arg0: i32, %arg1: i32) -> (i32, i32, i32) {
    %c0_i32 = arith.constant 0 : i32
    %c0_i32_0 = arith.constant 0 : i32
    %c0_i32_1 = arith.constant 0 : i32
    return %arg0, %c0_i32, %c0_i32_0 : i32, i32, i32
  }
}

</mosaic_0001>

<llo_original>
// kernel: tpu_custom_call.1
$region0: #{tpu_custom_call.1}
  #allocation0 [shape = 'u32[]', space=smem, size = 0x4, offset = 0x4, fixed_abs, tag = 'smem constant byte address 0x4 - core index']
  #allocation1 [shape = 'u32[144,128]{1,0:T(1,128)}', space=vmem, size = 0x12000, scoped, tag = 'internal scratch']
  #allocation2 [shape = 'f32[16,128]{1,0:T(8,128)}', space=vmem, size = 0x2000, scoped, tag = 'scratch operand']
  %s0 = inlined_call_operand.hbm [shape: f32[16,128], index: 0, kind: input, shape index: {}]
  %s1 = inlined_call_operand.hbm [shape: f32[16,128], index: 1, kind: input, shape index: {}]
  %s2 = inlined_call_operand.hbm [shape: f32[1,8,128], index: 2, kind: output, shape index: {}]
  %s3 = sld [smem:[#allocation0]]
  $region34: #{tpu_custom_call.1} parent=0
    _
  %s5 = ssub.s32 1, %s3
  %s6 = scalar_select 0, %s5, %s3
  $region1: #{tpu_custom_call.1} parent=0
    #allocation3 [shape = 'u8[8192]{0}', space=vmem, size = 0x2000, scoped, tag = 'input window, operand 0, single buffered']
    #allocation4 [shape = 's32[1]{0}', space=sflag, size = 0x4, scoped, tag = 'scoped memory for tpu_custom_call.1']
    #allocation5 [shape = 's32[1]{0}', space=sflag, size = 0x4, scoped, tag = 'scoped memory for tpu_custom_call.1']
    #allocation6 [shape = 'u8[8192]{0}', space=vmem, size = 0x2000, scoped, tag = 'input window, operand 1, single buffered']
    #allocation7 [shape = 's32[1]{0}', space=sflag, size = 0x4, scoped, tag = 'scoped memory for tpu_custom_call.1']
    #allocation8 [shape = 'u8[4096]{0}', space=vmem, size = 0x1000, scoped, tag = 'output window, operand 0, single buffered']
    %7 = vsyncpa [#allocation4], 0
    %8 = vsyncpa [#allocation7], 0
    %9 = vsyncpa [#allocation5], 0
    // Predicated region
    $region2: #{tpu_custom_call.1} parent=1 // pred_check
      _
    $region3: #{tpu_custom_call.1} parent=1 // pred_check_branch
      %11 = sbr.rel (0) target = $region5
    $region4: #{tpu_custom_call.1} parent=1 // pred_region
      %s12 = sadd.s32 0, 0
      %p13 = scmp.lt.s32.totalorder %s12, 0
      %s14 = scalar_select %p13, %s12, 0
      %s15 = smul.u32 2, %s14
      %s17 = ssub.s32 256, 256
      %18 = vsyncadd [#allocation4], %s17
      %s19 = smul.addr %s15, 128
      %s20 = scalar_lea.hbm %s0, %s19
      %s21 = sshll.u32 [#allocation3], 4
      %s22 = int_to_ptr.vmem [resolvable:$true] %s21
      %27 = dma.hbm_to_vmem [thread:$0]  %s20, 256, %s22, [#allocation4], 128, 128, 8
    $region5: #{tpu_custom_call.1} parent=1 // pred_fallthru
      _
    // Predicated region
    $region6: #{tpu_custom_call.1} parent=1 // pred_check
      _
    $region7: #{tpu_custom_call.1} parent=1 // pred_check_branch
      %29 = sbr.rel (0) target = $region9
    $region8: #{tpu_custom_call.1} parent=1 // pred_region
      %s30 = sadd.s32 0, 0
      %p31 = scmp.lt.s32.totalorder %s30, 0
      %s32 = scalar_select %p31, %s30, 0
      %s33 = smul.u32 2, %s32
      %s35 = ssub.s32 256, 256
      %36 = vsyncadd [#allocation7], %s35
      %s37 = smul.addr %s33, 128
      %s38 = scalar_lea.hbm %s1, %s37
      %s39 = sshll.u32 [#allocation6], 4
      %s40 = int_to_ptr.vmem [resolvable:$true] %s39
      %45 = dma.hbm_to_vmem [thread:$0]  %s38, 256, %s40, [#allocation7], 128, 128, 8
    $region9: #{tpu_custom_call.1} parent=1 // pred_fallthru
      _
    // Predicated region
    $region10: #{tpu_custom_call.1} parent=1 // pred_check
      _
    $region11: #{tpu_custom_call.1} parent=1 // pred_check_branch
      %47 = sbr.rel (0) target = $region13
    $region12: #{tpu_custom_call.1} parent=1 // pred_region
      %48 = dma.done [#allocation4], 256
    $region13: #{tpu_custom_call.1} parent=1 // pred_fallthru
      _
    // Predicated region
    $region14: #{tpu_custom_call.1} parent=1 // pred_check
      _
    $region15: #{tpu_custom_call.1} parent=1 // pred_check_branch
      %50 = sbr.rel (0) target = $region17
    $region16: #{tpu_custom_call.1} parent=1 // pred_region
      %51 = dma.done [#allocation7], 256
    $region17: #{tpu_custom_call.1} parent=1 // pred_fallthru
      _
    %s52 = sadd.s32 0, 0
    %p53 = scmp.lt.s32.totalorder %s52, 0
    %s54 = scalar_select %p53, %s52, 0
    %s55 = smul.u32 2, %s54
    %s56 = sadd.s32 0, 0
    %p57 = scmp.lt.s32.totalorder %s56, 0
    %s58 = scalar_select %p57, %s56, 0
    %s59 = smul.u32 2, %s58
    %p60 = scmp.eq.s32.totalorder 0, 0
    // Predicated region
    $region18: #{tpu_custom_call.1} parent=1 // pred_check
      %p61 = pneg %p60
    $region19: #{tpu_custom_call.1} parent=1 // pred_check_branch
      %63 = sbr.rel (%p61) target = $region21
    $region20: #{tpu_custom_call.1} parent=1 // pred_region
      %64 = vst [vmem:[#allocation2] sm:$0xff] 0.0
      %65 = vst [vmem:[#allocation2 + $0x8] sm:$0xff] 0.0
    $region21: #{tpu_custom_call.1} parent=1 // pred_fallthru
      _
    %v66 = vld [vmem:[#allocation3] sm:$0xff]
    %v67 = vld [vmem:[#allocation3 + $0x8] sm:$0xff]
    %v68 = vld [vmem:[#allocation6] sm:$0xff]
    %v69 = vld [vmem:[#allocation6 + $0x8] sm:$0xff]
    %v70 = vsub.f32 %v66, %v68
    %v71 = vsub.f32 %v67, %v69
    %v72 = vmul.f32 %v70, %v70
    %v73 = vmul.f32 %v71, %v71
    %v74 = vld [vmem:[#allocation2] sm:$0xff]
    %v75 = vld [vmem:[#allocation2 + $0x8] sm:$0xff]
    %v76 = vadd.f32 %v74, %v72
    %v77 = vadd.f32 %v75, %v73
    %78 = vst [vmem:[#allocation2] sm:$0xff] %v76
    %79 = vst [vmem:[#allocation2 + $0x8] sm:$0xff] %v77
    // Predicated region
    $region22: #{tpu_custom_call.1} parent=1 // pred_check
      %p80 = pneg %p60
    $region23: #{tpu_custom_call.1} parent=1 // pred_check_branch
      %82 = sbr.rel (%p80) target = $region25
    $region24: #{tpu_custom_call.1} parent=1 // pred_region
      %v83 = vld [vmem:[#allocation2] sm:$0xff]
      %v84 = vld [vmem:[#allocation2 + $0x8] sm:$0xff]
      %v85 = vadd.f32 %v83, %v84
      %86 = vadd.xlane.f32.xlu0 %v85
      %v87 = vpop.xlane.xlu0 %86
      %v88 = vrot.slane %v87, 4
      %v89 = vadd.f32 %v87, %v88
      %v90 = vrot.slane %v89, 2
      %v91 = vadd.f32 %v89, %v90
      %v92 = vrot.slane %v91, 1
      %v93 = vadd.f32 %v91, %v92
      %s94 = vtos %v93
      %v95 = vstv %s94
      %96 = vst [vmem:[#allocation8] sm:$0xff] %v95
    $region25: #{tpu_custom_call.1} parent=1 // pred_fallthru
      _
    // Predicated region
    $region26: #{tpu_custom_call.1} parent=1 // pred_check
      _
    $region27: #{tpu_custom_call.1} parent=1 // pred_check_branch
      %98 = sbr.rel (0) target = $region29
    $region28: #{tpu_custom_call.1} parent=1 // pred_region
      %s100 = ssub.s32 128, 128
      %101 = vsyncadd [#allocation5], %s100
      %s103 = sshll.u32 [#allocation8], 4
      %s104 = int_to_ptr.vmem [resolvable:$true] %s103
      %106 = dma.vmem_to_hbm [thread:$0]  %s104, 128, %s2, [#allocation5]
    $region29: #{tpu_custom_call.1} parent=1 // pred_fallthru
      _
    // Predicated region
    $region30: #{tpu_custom_call.1} parent=1 // pred_check
      _
    $region31: #{tpu_custom_call.1} parent=1 // pred_check_branch
      %108 = sbr.rel (0) target = $region33
    $region32: #{tpu_custom_call.1} parent=1 // pred_region
      %109 = dma.done [#allocation5], 128
    $region33: #{tpu_custom_call.1} parent=1 // pred_fallthru
      _
    %110 = vsyncpa [#allocation4], 1
    %111 = vsyncpa [#allocation7], 1
    %112 = vsyncpa [#allocation5], 1

</llo_original>
